<compile_context>
chip_gen: v7x
topology: tpu7x:2x2x1
jax: 0.10.0
libtpu: 0.0.40
codegen_flags: <defaults>
</compile_context>

<pallas_src>
import functools

import jax
import jax.numpy as jnp
from jax.experimental import pallas as pl
from jax.experimental.pallas import tpu as pltpu

_LANE = 128      # lane width (last dim)
_SUBLANE = 8     # f32 sublane width (second-to-last dim)
# Conservative VMEM request: leaves headroom on v7x (64 MiB physical per TC)
# and is far more than these block footprints need.
_VMEM_LIMIT = 32 * 1024 * 1024


def _round_up(n, m):
    return ((n + m - 1) // m) * m


# ----------------------------------------------------------------------------
# One-time parameter preparation (hoisted off the step path).
# ----------------------------------------------------------------------------
def prepare_params(w, b, input_size, hidden_size, compute_dtype=jnp.float32):
    """Split/transpose/pad the nn.Linear parameters once.

    w: (hidden_size, input_size + hidden_size)   PyTorch Linear weight
    b: (hidden_size,)                            PyTorch Linear bias
    compute_dtype: dtype for the MXU operands (bf16 ~2x throughput on v6e/v7x;
                   accumulation stays f32).
    """
    assert w.shape == (hidden_size, input_size + hidden_size)
    i_pad = _round_up(input_size, _SUBLANE)
    h_pad = _round_up(hidden_size, _LANE)

    w_t = w.T.astype(jnp.float32)                # (input+hidden, hidden)
    wx = jnp.zeros((i_pad, h_pad), jnp.float32).at[:input_size, :hidden_size].set(
        w_t[:input_size])
    wh = jnp.zeros((h_pad, h_pad), jnp.float32).at[:hidden_size, :hidden_size].set(
        w_t[input_size:])
    b2 = jnp.zeros((1, h_pad), jnp.float32).at[0, :hidden_size].set(b)
    return dict(wx=wx.astype(compute_dtype), wh=wh.astype(compute_dtype),
                b=b2,                                   # bias stays f32 (epilogue add)
                input_size=input_size, hidden_size=hidden_size,
                i_pad=i_pad, h_pad=h_pad)


# ----------------------------------------------------------------------------
# Single-step kernel (exact equivalent of RNN.forward).
# ----------------------------------------------------------------------------
def rnn_cell_kernel(x_ref, h_ref, wx_ref, wh_ref, b_ref, out_ref):
    wdt = wx_ref.dtype
    acc = jnp.dot(x_ref[...].astype(wdt), wx_ref[...],
                  preferred_element_type=jnp.float32) + b_ref[...]
    acc = acc + jnp.dot(h_ref[...].astype(wdt), wh_ref[...],
                        preferred_element_type=jnp.float32)
    out_ref[...] = acc.astype(out_ref.dtype)


def rnn_cell(x, h, params):
    """One RNN step: new_hidden = cat(x, h) @ W.T + b.

    NOTE: for a stepped decode loop, prefer rnn_sequence (this wrapper pays
    pad/slice + weight DMA per launch; it exists to mirror RNN.forward 1:1).
    """
    B, input_size = x.shape
    hidden_size = params["hidden_size"]
    i_pad, h_pad = params["i_pad"], params["h_pad"]
    b_pad = _round_up(B, _SUBLANE)

    x_p = jnp.zeros((b_pad, i_pad), jnp.float32).at[:B, :input_size].set(x)
    h_p = jnp.zeros((b_pad, h_pad), jnp.float32).at[:B, :hidden_size].set(h)

    out = pl.pallas_call(
        rnn_cell_kernel,
        out_shape=jax.ShapeDtypeStruct((b_pad, h_pad), jnp.float32),
        in_specs=[
            pl.BlockSpec((b_pad, i_pad), lambda: (0, 0)),
            pl.BlockSpec((b_pad, h_pad), lambda: (0, 0)),
            pl.BlockSpec((i_pad, h_pad), lambda: (0, 0)),
            pl.BlockSpec((h_pad, h_pad), lambda: (0, 0)),
            pl.BlockSpec((1, h_pad), lambda: (0, 0)),
        ],
        out_specs=pl.BlockSpec((b_pad, h_pad), lambda: (0, 0)),
        compiler_params=pltpu.CompilerParams(vmem_limit_bytes=_VMEM_LIMIT),
    )(x_p, h_p, params["wx"], params["wh"], params["b"])
    return out[:B, :hidden_size]


# ----------------------------------------------------------------------------
# Fused, time-blocked sequence kernel.
#   grid=(T/block_t,)  ("arbitrary" -- sequential carry in VMEM scratch).
#   Per chunk:  (1) one big GEMM  xproj = x_chunk @ W_x + b  -> output block,
#               (2) unrolled serial loop  h = xproj[k] + h @ W_h, overwriting
#                   the output block row-group k in place.
# ----------------------------------------------------------------------------
def rnn_fused_kernel(x_ref, h0_ref, wx_ref, wh_ref, b_ref, hs_ref, h_scratch,
                     *, block_t, b_pad):
    @pl.when(pl.program_id(0) == 0)
    def _():
        h_scratch[...] = h0_ref[...]

    wdt = wx_ref.dtype

    # (1) Chunk-wide input projection (bias folded in).  Staged straight into
    #     the output VMEM block -> no xproj HBM round-trip.
    hs_ref[...] = (jnp.dot(x_ref[...].astype(wdt), wx_ref[...],
                           preferred_element_type=jnp.float32)
                   + b_ref[...]).astype(hs_ref.dtype)

    wh = wh_ref[...]

    # (2) Serial recurrence over the chunk; only h @ W_h + xproj[t] is on the
    #     critical path.  Fully unrolled for LLO scheduling visibility.
    def step(k, h):
        off = pl.multiple_of(k * b_pad, b_pad)
        h_new = hs_ref[pl.ds(off, b_pad), :] + jnp.dot(
            h.astype(wdt), wh, preferred_element_type=jnp.float32)
        hs_ref[pl.ds(off, b_pad), :] = h_new
        return h_new

    h_last = jax.lax.fori_loop(0, block_t, step, h_scratch[...], unroll=True)
    h_scratch[...] = h_last            # carry across grid steps


def rnn_sequence(xs, h0, params, block_t=32):
    """Apply the RNN cell over a whole sequence in one fused kernel.

    xs: (T, B, input_size), h0: (B, hidden_size) -> (T, B, hidden_size)
    """
    T, B, input_size = xs.shape
    hidden_size = params["hidden_size"]
    i_pad, h_pad = params["i_pad"], params["h_pad"]
    b_pad = _round_up(B, _SUBLANE)

    block_t = max(1, min(block_t, T))
    T_pad = _round_up(T, block_t)
    n_chunks = T_pad // block_t
    rows = block_t * b_pad

    # Pad + flatten time/batch into one sublane-aligned row axis.
    xs_p = jnp.zeros((T_pad, b_pad, i_pad), jnp.float32)
    xs_p = xs_p.at[:T, :B, :input_size].set(xs)
    xs_flat = xs_p.reshape(T_pad * b_pad, i_pad)

    h0_p = jnp.zeros((b_pad, h_pad), jnp.float32).at[:B, :hidden_size].set(h0)

    flops = 2 * T_pad * b_pad * (i_pad + h_pad) * h_pad
    bytes_accessed = 4 * (T_pad * b_pad * (i_pad + h_pad)
                          + (i_pad + h_pad + 1) * h_pad + b_pad * h_pad)

    kernel = functools.partial(rnn_fused_kernel, block_t=block_t, b_pad=b_pad)

    hs_flat = pl.pallas_call(
        kernel,
        out_shape=jax.ShapeDtypeStruct((T_pad * b_pad, h_pad), jnp.float32),
        grid=(n_chunks,),
        in_specs=[
            pl.BlockSpec((rows, i_pad), lambda t: (t, 0)),      # x chunk (pipelined)
            pl.BlockSpec((b_pad, h_pad), lambda t: (0, 0)),     # h0, fetched once
            pl.BlockSpec((i_pad, h_pad), lambda t: (0, 0)),     # W_x weight-stationary
            pl.BlockSpec((h_pad, h_pad), lambda t: (0, 0)),     # W_h weight-stationary
            pl.BlockSpec((1, h_pad), lambda t: (0, 0)),         # bias-stationary
        ],
        out_specs=pl.BlockSpec((rows, h_pad), lambda t: (t, 0)),
        scratch_shapes=[pltpu.VMEM((b_pad, h_pad), jnp.float32)],
        compiler_params=pltpu.CompilerParams(
            dimension_semantics=("arbitrary",),
            vmem_limit_bytes=_VMEM_LIMIT),
        cost_estimate=pl.CostEstimate(
            flops=flops, transcendentals=0, bytes_accessed=bytes_accessed),
    )(xs_flat, h0_p, params["wx"], params["wh"], params["b"])

    hs = hs_flat.reshape(T_pad, b_pad, h_pad)
    return hs[:T, :B, :hidden_size]


# ----------------------------------------------------------------------------
# Pure-JAX references
# ----------------------------------------------------------------------------
def rnn_cell_ref(x, h, w, b):
    return jnp.concatenate([x, h], axis=1) @ w.T + b


def rnn_sequence_ref(xs, h0, w, b):
    def step(h, x):
        h_new = rnn_cell_ref(x, h, w, b)
        return h_new, h_new
    _, hs = jax.lax.scan(step, h0, xs)
    return hs


if __name__ == "__main__":
    key = jax.random.PRNGKey(0)
    batch = 2
    input_size = 16
    hidden_size = 32
    seq_len = 8

    k_x, k_h, k_w, k_b, k_seq = jax.random.split(key, 5)
    x = jax.random.normal(k_x, (batch, input_size), dtype=jnp.float32)
    h = jax.random.normal(k_h, (batch, hidden_size), dtype=jnp.float32)
    xs = jax.random.normal(k_seq, (seq_len, batch, input_size), dtype=jnp.float32)

    # nn.Linear-style init: U(-1/sqrt(fan_in), 1/sqrt(fan_in))
    fan_in = input_size + hidden_size
    bound = 1.0 / (fan_in ** 0.5)
    w = jax.random.uniform(k_w, (hidden_size, fan_in), dtype=jnp.float32,
                           minval=-bound, maxval=bound)
    b = jax.random.uniform(k_b, (hidden_size,), dtype=jnp.float32,
                           minval=-bound, maxval=bound)

    # Weight prep done ONCE (split / transpose / pad) -- off the step path.
    # (compute_dtype=jnp.bfloat16 for ~2x MXU throughput on v6e/v7x.)
    params = prepare_params(w, b, input_size, hidden_size,
                            compute_dtype=jnp.float32)

    # --- single step (== RNN.forward) ---
    out = jax.block_until_ready(rnn_cell(x, h, params))
    ref = rnn_cell_ref(x, h, w, b)
    assert out.shape == (batch, hidden_size)
    assert jnp.allclose(out, ref, atol=1e-5, rtol=1e-5), "single-step mismatch"

    # --- fused, time-blocked sequence ---
    h0 = jnp.zeros((batch, hidden_size), jnp.float32)   # RNN.initHidden, batched
    hs_ref = rnn_sequence_ref(xs, h0, w, b)

    # single chunk (block_t clamps to T)
    hs = jax.block_until_ready(rnn_sequence(xs, h0, params))
    assert hs.shape == (seq_len, batch, hidden_size)
    assert jnp.allclose(hs, hs_ref, atol=1e-4, rtol=1e-4), "sequence mismatch"

    # multi-chunk (exercises the cross-grid-step hidden carry in VMEM scratch)
    hs2 = jax.block_until_ready(rnn_sequence(xs, h0, params, block_t=4))
    assert jnp.allclose(hs2, hs_ref, atol=1e-4, rtol=1e-4), "chunked mismatch"

    # non-dividing chunk size (exercises time padding + output slice)
    hs3 = jax.block_until_ready(rnn_sequence(xs, h0, params, block_t=3))
    assert jnp.allclose(hs3, hs_ref, atol=1e-4, rtol=1e-4), "padded-chunk mismatch"

    print("KERNEL_OK")
</pallas_src>

<mosaic_0001>
module attributes {stable_mosaic.version = 11 : i64} {
  func.func @rnn_cell_kernel(%arg0: memref<8x16xf32, #tpu.memory_space<vmem>>, %arg1: memref<8x128xf32, #tpu.memory_space<vmem>>, %arg2: memref<16x128xf32, #tpu.memory_space<vmem>>, %arg3: memref<128x128xf32, #tpu.memory_space<vmem>>, %arg4: memref<1x128xf32, #tpu.memory_space<vmem>>, %arg5: memref<8x128xf32, #tpu.memory_space<vmem>>) attributes {dimension_semantics = [], scalar_prefetch = 0 : i64, scratch_operands = 0 : i64, tpu.core_type = #tpu.core_type<tc>} {
    %c0 = arith.constant 0 : index
    %c0_0 = arith.constant 0 : index
    %0 = vector.load %arg0[%c0, %c0_0] : memref<8x16xf32, #tpu.memory_space<vmem>>, vector<8x16xf32>
    %c0_1 = arith.constant 0 : index
    %c0_2 = arith.constant 0 : index
    %1 = vector.load %arg2[%c0_1, %c0_2] : memref<16x128xf32, #tpu.memory_space<vmem>>, vector<16x128xf32>
    %cst = arith.constant dense<0.000000e+00> : vector<8x128xf32>
    %2 = tpu.matmul %0, %1, %cst {dimension_numbers = #tpu.dot_dimension_numbers<[1], [0], [0], [1], [0, 0, 1, 1], [], []>} : vector<8x16xf32>, vector<16x128xf32>, vector<8x128xf32> -> vector<8x128xf32>
    %c0_3 = arith.constant 0 : index
    %c0_4 = arith.constant 0 : index
    %3 = vector.load %arg4[%c0_3, %c0_4] : memref<1x128xf32, #tpu.memory_space<vmem>>, vector<1x128xf32>
    %4 = vector.broadcast %3 : vector<1x128xf32> to vector<8x128xf32>
    %5 = arith.addf %2, %4 : vector<8x128xf32>
    %c0_5 = arith.constant 0 : index
    %c0_6 = arith.constant 0 : index
    %6 = vector.load %arg1[%c0_5, %c0_6] : memref<8x128xf32, #tpu.memory_space<vmem>>, vector<8x128xf32>
    %c0_7 = arith.constant 0 : index
    %c0_8 = arith.constant 0 : index
    %7 = vector.load %arg3[%c0_7, %c0_8] : memref<128x128xf32, #tpu.memory_space<vmem>>, vector<128x128xf32>
    %cst_9 = arith.constant dense<0.000000e+00> : vector<8x128xf32>
    %8 = tpu.matmul %6, %7, %cst_9 {dimension_numbers = #tpu.dot_dimension_numbers<[1], [0], [0], [1], [0, 0, 1, 1], [], []>} : vector<8x128xf32>, vector<128x128xf32>, vector<8x128xf32> -> vector<8x128xf32>
    %9 = arith.addf %5, %8 : vector<8x128xf32>
    %c0_10 = arith.constant 0 : index
    %c0_11 = arith.constant 0 : index
    %10 = vector.load %arg5[%c0_10, %c0_11] : memref<8x128xf32, #tpu.memory_space<vmem>>, vector<8x128xf32>
    tpu.vector_store %arg5[%c0_10, %c0_11], %9 {strides = array<i32>} : memref<8x128xf32, #tpu.memory_space<vmem>>, vector<8x128xf32>,
    return
  }
}

</mosaic_0001>

<llo_original>
// kernel: tpu_custom_call.1
$region0: #{tpu_custom_call.1}
  #allocation0 [shape = 'u32[]', space=smem, size = 0x4, offset = 0x4, fixed_abs, tag = 'smem constant byte address 0x4 - core index']
  #allocation1 [shape = 'u32[144,128]{1,0:T(1,128)}', space=vmem, size = 0x12000, scoped, tag = 'internal scratch']
  %s0 = inlined_call_operand.hbm [shape: f32[8,16], index: 0, kind: input, shape index: {}]
  %s1 = inlined_call_operand.hbm [shape: f32[8,128], index: 1, kind: input, shape index: {}]
  %s2 = inlined_call_operand.hbm [shape: f32[16,128], index: 2, kind: input, shape index: {}]
  %s3 = inlined_call_operand.hbm [shape: f32[128,128], index: 3, kind: input, shape index: {}]
  %s4 = inlined_call_operand.vmem [shape: f32[1,128], index: 4, kind: input, shape index: {}]
  %s5 = inlined_call_operand.hbm [shape: f32[8,128], index: 5, kind: output, shape index: {}]
  %s6 = sld [smem:[#allocation0]]
  $region46: #{tpu_custom_call.1} parent=0
    _
  %s8 = ssub.s32 1, %s6
  %s9 = scalar_select 0, %s8, %s6
  $region1: #{tpu_custom_call.1} parent=0
    #allocation2 [shape = 'u8[4096]{0}', space=vmem, size = 0x1000, scoped, tag = 'input window, operand 0, single buffered']
    #allocation3 [shape = 's32[1]{0}', space=sflag, size = 0x4, scoped, tag = 'scoped memory for tpu_custom_call.1']
    #allocation4 [shape = 's32[1]{0}', space=sflag, size = 0x4, scoped, tag = 'scoped memory for tpu_custom_call.1']
    #allocation5 [shape = 'u8[4096]{0}', space=vmem, size = 0x1000, scoped, tag = 'input window, operand 1, single buffered']
    #allocation6 [shape = 's32[1]{0}', space=sflag, size = 0x4, scoped, tag = 'scoped memory for tpu_custom_call.1']
    #allocation7 [shape = 'u8[8192]{0}', space=vmem, size = 0x2000, scoped, tag = 'input window, operand 2, single buffered']
    #allocation8 [shape = 'u8[65536]{0}', space=vmem, size = 0x10000, scoped, tag = 'input window, operand 3, single buffered']
    #allocation9 [shape = 's32[1]{0}', space=sflag, size = 0x4, scoped, tag = 'scoped memory for tpu_custom_call.1']
    #allocation10 [shape = 'u8[4096]{0}', space=vmem, size = 0x1000, scoped, tag = 'output window, operand 0, single buffered']
    %10 = vsyncpa [#allocation3], 0
    %11 = vsyncpa [#allocation6], 0
    %12 = vsyncpa [#allocation9], 0
    %13 = vsyncpa [#allocation4], 0
    // Predicated region
    $region2: #{tpu_custom_call.1} parent=1 // pred_check
      _
    $region3: #{tpu_custom_call.1} parent=1 // pred_check_branch
      %15 = sbr.rel (0) target = $region5
    $region4: #{tpu_custom_call.1} parent=1 // pred_region
      %s17 = ssub.s32 128, 128
      %18 = vsyncadd [#allocation3], %s17
      %s20 = sshll.u32 [#allocation2], 4
      %s21 = int_to_ptr.vmem [resolvable:$true] %s20
      %23 = dma.hbm_to_vmem [thread:$0]  %s0, 128, %s21, [#allocation3]
    $region5: #{tpu_custom_call.1} parent=1 // pred_fallthru
      _
    // Predicated region
    $region6: #{tpu_custom_call.1} parent=1 // pred_check
      _
    $region7: #{tpu_custom_call.1} parent=1 // pred_check_branch
      %25 = sbr.rel (0) target = $region9
    $region8: #{tpu_custom_call.1} parent=1 // pred_region
      %s27 = ssub.s32 128, 128
      %28 = vsyncadd [#allocation6], %s27
      %s30 = sshll.u32 [#allocation5], 4
      %s31 = int_to_ptr.vmem [resolvable:$true] %s30
      %33 = dma.hbm_to_vmem [thread:$0]  %s1, 128, %s31, [#allocation6]
    $region9: #{tpu_custom_call.1} parent=1 // pred_fallthru
      _
    // Predicated region
    $region10: #{tpu_custom_call.1} parent=1 // pred_check
      _
    $region11: #{tpu_custom_call.1} parent=1 // pred_check_branch
      %35 = sbr.rel (0) target = $region13
    $region12: #{tpu_custom_call.1} parent=1 // pred_region
      %s37 = ssub.s32 256, 256
      %38 = vsyncadd [#allocation6], %s37
      %s39 = sshll.u32 [#allocation7], 4
      %s40 = int_to_ptr.vmem [resolvable:$true] %s39
      %45 = dma.hbm_to_vmem [thread:$0]  %s2, 256, %s40, [#allocation6], 128, 128, 8
    $region13: #{tpu_custom_call.1} parent=1 // pred_fallthru
      _
    // Predicated region
    $region14: #{tpu_custom_call.1} parent=1 // pred_check
      _
    $region15: #{tpu_custom_call.1} parent=1 // pred_check_branch
      %47 = sbr.rel (0) target = $region17
    $region16: #{tpu_custom_call.1} parent=1 // pred_region
      %s49 = ssub.s32 2048, 2048
      %50 = vsyncadd [#allocation9], %s49
      %s51 = sshll.u32 [#allocation8], 4
      %s52 = int_to_ptr.vmem [resolvable:$true] %s51
      %57 = dma.hbm_to_vmem [thread:$0]  %s3, 2048, %s52, [#allocation9], 128, 128, 8
    $region17: #{tpu_custom_call.1} parent=1 // pred_fallthru
      _
    // Predicated region
    $region18: #{tpu_custom_call.1} parent=1 // pred_check
      _
    $region19: #{tpu_custom_call.1} parent=1 // pred_check_branch
      %59 = sbr.rel (0) target = $region21
    $region20: #{tpu_custom_call.1} parent=1 // pred_region
      _
    $region21: #{tpu_custom_call.1} parent=1 // pred_fallthru
      _
    // Predicated region
    $region22: #{tpu_custom_call.1} parent=1 // pred_check
      _
    $region23: #{tpu_custom_call.1} parent=1 // pred_check_branch
      %61 = sbr.rel (0) target = $region25
    $region24: #{tpu_custom_call.1} parent=1 // pred_region
      %62 = dma.done [#allocation3], 128
    $region25: #{tpu_custom_call.1} parent=1 // pred_fallthru
      _
    // Predicated region
    $region26: #{tpu_custom_call.1} parent=1 // pred_check
      _
    $region27: #{tpu_custom_call.1} parent=1 // pred_check_branch
      %64 = sbr.rel (0) target = $region29
    $region28: #{tpu_custom_call.1} parent=1 // pred_region
      %65 = dma.done [#allocation6], 128
    $region29: #{tpu_custom_call.1} parent=1 // pred_fallthru
      _
    // Predicated region
    $region30: #{tpu_custom_call.1} parent=1 // pred_check
      _
    $region31: #{tpu_custom_call.1} parent=1 // pred_check_branch
      %67 = sbr.rel (0) target = $region33
    $region32: #{tpu_custom_call.1} parent=1 // pred_region
      %68 = dma.done [#allocation6], 256
    $region33: #{tpu_custom_call.1} parent=1 // pred_fallthru
      _
    // Predicated region
    $region34: #{tpu_custom_call.1} parent=1 // pred_check
      _
    $region35: #{tpu_custom_call.1} parent=1 // pred_check_branch
      %70 = sbr.rel (0) target = $region37
    $region36: #{tpu_custom_call.1} parent=1 // pred_region
      %71 = dma.done [#allocation9], 2048
    $region37: #{tpu_custom_call.1} parent=1 // pred_fallthru
      _
    %v72 = vld [vmem:[#allocation2] sm:$0xff]
    %v73 = vld [vmem:[#allocation7] sm:$0xff]
    %v74 = vld [vmem:[#allocation7 + $0x8] sm:$0xff]
    %v75 = vld [vmem:[%s4] sm:$0x1]
    %v77 = vlaneseq
    %v78 = vshrl.u32 %v77, 7
    %v79 = vsub.s32 0, %v78
    %v80 = vrot.slane %v75, %v79
    %vm82 = vcmask 130048
    %v84 = vsel %vm82, %v72, 0
    %86 = vmatprep.subr.mxu0 0.0
    %87 = vmatpush1.msra.mxu0 %v73
    %88 = vmatprep.subr.mxu0 0.0
    %89 = vmatpush1.msra.mxu0 %v74
    %90 = vmatprep.subr.mxu0 0.0
    %91 = vmatpush1.msra.mxu0 0.0
    %92 = vmatprep.subr.mxu0 0.0
    %93 = vmatpush1.msra.mxu0 0.0
    %94 = vmatprep.subr.mxu0 0.0
    %95 = vmatpush1.msra.mxu0 0.0
    %96 = vmatprep.subr.mxu0 0.0
    %97 = vmatpush1.msra.mxu0 0.0
    %98 = vmatprep.subr.mxu0 0.0
    %99 = vmatpush1.msra.mxu0 0.0
    %100 = vmatprep.subr.mxu0 0.0
    %101 = vmatpush1.msra.mxu0 0.0
    %102 = vmatprep.subr.mxu0 0.0
    %103 = vmatpush1.msra.mxu0 0.0
    %104 = vmatprep.subr.mxu0 0.0
    %105 = vmatpush1.msra.mxu0 0.0
    %106 = vmatprep.subr.mxu0 0.0
    %107 = vmatpush1.msra.mxu0 0.0
    %108 = vmatprep.subr.mxu0 0.0
    %109 = vmatpush1.msra.mxu0 0.0
    %110 = vmatprep.subr.mxu0 0.0
    %111 = vmatpush1.msra.mxu0 0.0
    %112 = vmatprep.subr.mxu0 0.0
    %113 = vmatpush1.msra.mxu0 0.0
    %114 = vmatprep.subr.mxu0 0.0
    %115 = vmatpush1.msra.mxu0 0.0
    %116 = vmatprep.subr.mxu0 0.0
    %117 = vmatpush1.msra.mxu0 0.0
    %118 = vmatprep.subr.mxu0 0.0
    %119 = vmatpush1.msra.mxu0 0.0
    %120 = vmatprep.subr.mxu0 0.0
    %121 = vmatpush1.msra.mxu0 0.0
    %122 = vmatprep.subr.mxu0 0.0
    %123 = vmatpush1.msra.mxu0 0.0
    %124 = vmatprep.subr.mxu0 0.0
    %125 = vmatpush1.msra.mxu0 0.0
    %126 = vmatprep.subr.mxu0 0.0
    %127 = vmatpush1.msra.mxu0 0.0
    %128 = vmatprep.subr.mxu0 0.0
    %129 = vmatpush1.msra.mxu0 0.0
    %130 = vmatprep.subr.mxu0 0.0
    %131 = vmatpush1.msra.mxu0 0.0
    %132 = vmatprep.subr.mxu0 0.0
    %133 = vmatpush1.msra.mxu0 0.0
    %134 = vmatprep.subr.mxu0 0.0
    %135 = vmatpush1.msra.mxu0 0.0
    %136 = vmatprep.subr.mxu0 0.0
    %137 = vmatpush1.msra.mxu0 0.0
    %138 = vmatprep.subr.mxu0 0.0
    %139 = vmatpush1.msra.mxu0 0.0
    %140 = vmatprep.subr.mxu0 0.0
    %141 = vmatpush1.msra.mxu0 0.0
    %142 = vmatprep.subr.mxu0 0.0
    %143 = vmatpush1.msra.mxu0 0.0
    %144 = vmatprep.subr.mxu0 0.0
    %145 = vmatpush1.msra.mxu0 0.0
    %146 = vmatprep.subr.mxu0 0.0
    %147 = vmatpush1.msra.mxu0 0.0
    %148 = vmatprep.subr.mxu0 0.0
    %149 = vmatpush1.msra.mxu0 0.0
    %150 = vmatprep.mubr.f32.mxu0 0.0
    %151 = vmatmul.mubr.f32.gmra.mrb[0].mxu0 %v84
    %v152 = vpop.f32.mrb[0].mxu0
    %v153 = vadd.f32 %v80, %v152
    %v154 = vpop.f32.mrb[0].mxu0
    %155 = vdwg.mxu0
    %v156 = vld [vmem:[#allocation5] sm:$0xff]
    %v157 = vld [vmem:[#allocation8] sm:$0xff]
    %v158 = vld [vmem:[#allocation8 + $0x8] sm:$0xff]
    %v159 = vld [vmem:[#allocation8 + $0x10] sm:$0xff]
    %v160 = vld [vmem:[#allocation8 + $0x18] sm:$0xff]
    %v161 = vld [vmem:[#allocation8 + $0x20] sm:$0xff]
    %v162 = vld [vmem:[#allocation8 + $0x28] sm:$0xff]
    %v163 = vld [vmem:[#allocation8 + $0x30] sm:$0xff]
    %v164 = vld [vmem:[#allocation8 + $0x38] sm:$0xff]
    %v165 = vld [vmem:[#allocation8 + $0x40] sm:$0xff]
    %v166 = vld [vmem:[#allocation8 + $0x48] sm:$0xff]
    %v167 = vld [vmem:[#allocation8 + $0x50] sm:$0xff]
    %v168 = vld [vmem:[#allocation8 + $0x58] sm:$0xff]
    %v169 = vld [vmem:[#allocation8 + $0x60] sm:$0xff]
    %v170 = vld [vmem:[#allocation8 + $0x68] sm:$0xff]
    %v171 = vld [vmem:[#allocation8 + $0x70] sm:$0xff]
    %v172 = vld [vmem:[#allocation8 + $0x78] sm:$0xff]
    %173 = vmatprep.subr.mxu0 0.0
    %174 = vmatpush1.msra.mxu0 %v157
    %175 = vmatprep.subr.mxu0 0.0
    %176 = vmatpush1.msra.mxu0 %v158
    %177 = vmatprep.subr.mxu0 0.0
    %178 = vmatpush1.msra.mxu0 %v159
    %179 = vmatprep.subr.mxu0 0.0
    %180 = vmatpush1.msra.mxu0 %v160
    %181 = vmatprep.subr.mxu0 0.0
    %182 = vmatpush1.msra.mxu0 %v161
    %183 = vmatprep.subr.mxu0 0.0
    %184 = vmatpush1.msra.mxu0 %v162
    %185 = vmatprep.subr.mxu0 0.0
    %186 = vmatpush1.msra.mxu0 %v163
    %187 = vmatprep.subr.mxu0 0.0
    %188 = vmatpush1.msra.mxu0 %v164
    %189 = vmatprep.subr.mxu0 0.0
    %190 = vmatpush1.msra.mxu0 %v165
    %191 = vmatprep.subr.mxu0 0.0
    %192 = vmatpush1.msra.mxu0 %v166
    %193 = vmatprep.subr.mxu0 0.0
    %194 = vmatpush1.msra.mxu0 %v167
    %195 = vmatprep.subr.mxu0 0.0
    %196 = vmatpush1.msra.mxu0 %v168
    %197 = vmatprep.subr.mxu0 0.0
    %198 = vmatpush1.msra.mxu0 %v169
    %199 = vmatprep.subr.mxu0 0.0
    %200 = vmatpush1.msra.mxu0 %v170
    %201 = vmatprep.subr.mxu0 0.0
    %202 = vmatpush1.msra.mxu0 %v171
    %203 = vmatprep.subr.mxu0 0.0
    %204 = vmatpush1.msra.mxu0 %v172
    %205 = vmatprep.subr.mxu0 0.0
    %206 = vmatpush1.msra.mxu0 0.0
    %207 = vmatprep.subr.mxu0 0.0
    %208 = vmatpush1.msra.mxu0 0.0
    %209 = vmatprep.subr.mxu0 0.0
    %210 = vmatpush1.msra.mxu0 0.0
    %211 = vmatprep.subr.mxu0 0.0
    %212 = vmatpush1.msra.mxu0 0.0
    %213 = vmatprep.subr.mxu0 0.0
    %214 = vmatpush1.msra.mxu0 0.0
    %215 = vmatprep.subr.mxu0 0.0
    %216 = vmatpush1.msra.mxu0 0.0
    %217 = vmatprep.subr.mxu0 0.0
    %218 = vmatpush1.msra.mxu0 0.0
    %219 = vmatprep.subr.mxu0 0.0
    %220 = vmatpush1.msra.mxu0 0.0
    %221 = vmatprep.subr.mxu0 0.0
    %222 = vmatpush1.msra.mxu0 0.0
    %223 = vmatprep.subr.mxu0 0.0
    %224 = vmatpush1.msra.mxu0 0.0
    %225 = vmatprep.subr.mxu0 0.0
    %226 = vmatpush1.msra.mxu0 0.0
    %227 = vmatprep.subr.mxu0 0.0
    %228 = vmatpush1.msra.mxu0 0.0
    %229 = vmatprep.subr.mxu0 0.0
    %230 = vmatpush1.msra.mxu0 0.0
    %231 = vmatprep.subr.mxu0 0.0
    %232 = vmatpush1.msra.mxu0 0.0
    %233 = vmatprep.subr.mxu0 0.0
    %234 = vmatpush1.msra.mxu0 0.0
    %235 = vmatprep.subr.mxu0 0.0
    %236 = vmatpush1.msra.mxu0 0.0
    %237 = vmatprep.mubr.f32.mxu0 0.0
    %238 = vmatmul.mubr.f32.gmra.mrb[0].mxu0 %v156
    %v239 = vpop.f32.mrb[0].mxu0
    %v240 = vadd.f32 0.0, %v239
    %v241 = vpop.f32.mrb[0].mxu0
    %242 = vdwg.mxu0
    %v243 = vadd.f32 %v153, %v240
    %244 = vst [vmem:[#allocation10] sm:$0xff] %v243
    // Predicated region
    $region38: #{tpu_custom_call.1} parent=1 // pred_check
      _
    $region39: #{tpu_custom_call.1} parent=1 // pred_check_branch
      %246 = sbr.rel (0) target = $region41
    $region40: #{tpu_custom_call.1} parent=1 // pred_region
      %s248 = ssub.s32 128, 128
      %249 = vsyncadd [#allocation4], %s248
      %s251 = sshll.u32 [#allocation10], 4
      %s252 = int_to_ptr.vmem [resolvable:$true] %s251
      %254 = dma.vmem_to_hbm [thread:$0]  %s252, 128, %s5, [#allocation4]
    $region41: #{tpu_custom_call.1} parent=1 // pred_fallthru
      _
    // Predicated region
    $region42: #{tpu_custom_call.1} parent=1 // pred_check
      _
    $region43: #{tpu_custom_call.1} parent=1 // pred_check_branch
      %256 = sbr.rel (0) target = $region45
    $region44: #{tpu_custom_call.1} parent=1 // pred_region
      %257 = dma.done [#allocation4], 128
    $region45: #{tpu_custom_call.1} parent=1 // pred_fallthru
      _
    %258 = vsyncpa [#allocation3], 1
    %259 = vsyncpa [#allocation6], 1
    %260 = vsyncpa [#allocation9], 1
    %261 = vsyncpa [#allocation4], 1

</llo_original>
